<compile_context>
chip_gen: v7x
topology: tpu7x:2x2x1
jax: 0.10.0
libtpu: 0.0.40
codegen_flags: <defaults>
</compile_context>

<pallas_src>
import jax
import jax.numpy as jnp
from jax.experimental import pallas as pl
from jax.experimental.pallas import tpu as pltpu


def _round_up(x, m):
    return ((x + m - 1) // m) * m


def _vmem_budget_bytes():
    """~80% of this generation's physical VMEM (v5e/v6e: 128 MiB, v7x: 64 MiB)."""
    cap = None
    try:
        cap = getattr(pltpu.get_tpu_info(), "vmem_capacity_bytes", None)
    except Exception:
        cap = None
    if not cap:
        cap = 64 * 1024 * 1024  # conservative fallback (v7x-sized)
    return int(0.80 * cap)


def _vmem_estimate(tm, th, E, c_item, o_item):
    """Per-step VMEM footprint incl. double buffers, f32 accumulator and the
    materialized (tm, th) f32 intermediate + its bf16 cast copy."""
    est = (2 * tm * E * c_item        # x tile (double buffered)
           + 2 * E * th * c_item      # w_fc tile
           + 2 * th * E * c_item      # w_proj tile
           + 2 * tm * E * o_item      # output tile
           + tm * E * 4               # f32 accumulator scratch
           + tm * th * (4 + c_item))  # f32 h + bf16 cast of h
    return int(1.2 * est) + (1 << 20)  # headroom for Mosaic internal scratch


def _select_tiles(M, E, H, c_item, o_item, budget, tm, th):
    """Pick (tm, th) fitting the per-generation VMEM budget."""
    # --- M tile ---
    if tm is None:
        m8 = _round_up(M, 8)
        if m8 <= 512:
            # Small / decode-ish M: split into >=2 tiles so the 'parallel' M axis
            # feeds both TensorCores on v7x (harmless elsewhere).
            tm = _round_up((m8 + 1) // 2, 8) if m8 >= 16 else m8
        else:
            # >= HBM-roofline crossover for streamed weights on v5e/v6e/v7x.
            tm = 512
    tm_cands, seen = [], set()
    for t in (tm, 384, 256, 128, 64, 8):
        if t <= tm and t not in seen:
            seen.add(t)
            tm_cands.append(t)

    stream_cands = [c for c in (1024, 512, 256, 128) if c < H and H % c == 0]

    if th is not None:
        for t in tm_cands:
            if _vmem_estimate(t, th, E, c_item, o_item) <= budget:
                return t, th
        return tm_cands[-1], th

    # Pass 1: weights fully VMEM-resident (th = H): constant weight block index ->
    # each weight matrix is DMA'd from HBM exactly once for the whole call.
    for t in tm_cands:
        if _vmem_estimate(t, H, E, c_item, o_item) <= budget:
            return t, H
    # Pass 2: stream weight tiles; largest tm first (intensity ~ tm flops/byte),
    # then the largest th that divides H and fits.
    for t in tm_cands:
        for h in stream_cands:
            if _vmem_estimate(t, h, E, c_item, o_item) <= budget:
                return t, h
    # Last resort: smallest footprint we can express.
    return tm_cands[-1], (stream_cands[-1] if stream_cands else H)


def _mlp_kernel(x_ref, w_fc_ref, w_proj_ref, o_ref, acc_ref):
    # x_ref:      (TM, E)   compute dtype (bf16)
    # w_fc_ref:   (E, TH)   compute dtype
    # w_proj_ref: (TH, E)   compute dtype
    # o_ref:      (TM, E)   output dtype
    # acc_ref:    (TM, E)   f32 accumulator (VMEM scratch, persists across hidden tiles)
    k = pl.program_id(1)

    @pl.when(k == 0)
    def _():
        acc_ref[...] = jnp.zeros_like(acc_ref)

    h = jnp.dot(x_ref[...], w_fc_ref[...], preferred_element_type=jnp.float32)
    h = jnp.maximum(h, 0.0)          # relu
    h = h * h                        # .square()
    acc_ref[...] += jnp.dot(
        h.astype(w_proj_ref.dtype), w_proj_ref[...],
        preferred_element_type=jnp.float32,
    )

    @pl.when(k == pl.num_programs(1) - 1)
    def _():
        o_ref[...] = acc_ref[...].astype(o_ref.dtype)


def prepare_mlp_weights(w_fc, w_proj, compute_dtype=jnp.bfloat16):
    """Cast weights to the MXU compute dtype ONCE at init (hoisted off the hot path)."""
    return w_fc.astype(compute_dtype), w_proj.astype(compute_dtype)


def mlp_pallas(x, w_fc, w_proj, *, tm=None, th=None, compute_dtype=jnp.bfloat16):
    """x: (..., E); w_fc: (E, 4E); w_proj: (4E, E). Returns same shape/dtype as x."""
    orig_shape = x.shape
    out_dtype = x.dtype
    E = orig_shape[-1]
    H = w_fc.shape[1]
    assert w_fc.shape == (E, H) and w_proj.shape == (H, E)

    # Weights should already be in compute dtype (prepare_mlp_weights); fallback cast only.
    if w_fc.dtype != compute_dtype:
        w_fc = w_fc.astype(compute_dtype)
    if w_proj.dtype != compute_dtype:
        w_proj = w_proj.astype(compute_dtype)

    x2d = x.reshape(-1, E)
    M = x2d.shape[0]

    c_item = jnp.dtype(compute_dtype).itemsize
    o_item = jnp.dtype(out_dtype).itemsize
    budget = _vmem_budget_bytes()

    tm, th = _select_tiles(M, E, H, c_item, o_item, budget, tm, th)
    assert H % th == 0, f"hidden tile {th} must divide H={H}"

    M_pad = _round_up(M, tm)
    if M_pad != M:
        x2d = jnp.pad(x2d, ((0, M_pad - M), (0, 0)))
    xc = x2d.astype(compute_dtype)

    grid = (M_pad // tm, H // th)

    vmem_est = _vmem_estimate(tm, th, E, c_item, o_item)
    vmem_limit = int(min(max(vmem_est, 16 * 1024 * 1024), budget))

    # Weights are re-fetched once per M tile only when streamed (th < H); with th == H
    # the weight block index is constant so they are DMA'd exactly once.
    weight_refetch = 1 if th == H else grid[0]
    cost = pl.CostEstimate(
        flops=4 * M_pad * E * H,                       # two matmuls, 2 flops/MAC
        transcendentals=0,
        bytes_accessed=int(M_pad * E * c_item
                           + weight_refetch * (w_fc.size + w_proj.size) * c_item
                           + M_pad * E * o_item),
    )

    out = pl.pallas_call(
        _mlp_kernel,
        out_shape=jax.ShapeDtypeStruct((M_pad, E), out_dtype),
        grid_spec=pltpu.PrefetchScalarGridSpec(
            num_scalar_prefetch=0,
            grid=grid,
            in_specs=[
                pl.BlockSpec((tm, E), lambda i, k: (i, 0)),   # x tile (constant over k)
                pl.BlockSpec((E, th), lambda i, k: (0, k)),   # w_fc column tile
                pl.BlockSpec((th, E), lambda i, k: (k, 0)),   # w_proj row tile
            ],
            out_specs=pl.BlockSpec((tm, E), lambda i, k: (i, 0)),
            scratch_shapes=[pltpu.VMEM((tm, E), jnp.float32)],
        ),
        compiler_params=pltpu.CompilerParams(
            dimension_semantics=("parallel", "arbitrary"),
            vmem_limit_bytes=vmem_limit,
        ),
        cost_estimate=cost,
    )(xc, w_fc, w_proj)

    if M_pad != M:
        out = out[:M]
    return out.reshape(orig_shape)


def _ref_f32(x, w_fc, w_proj):
    E = x.shape[-1]
    h = jnp.maximum(x.reshape(-1, E) @ w_fc, 0.0) ** 2
    return (h @ w_proj).reshape(x.shape)


def _ref_bf16(x, w_fc, w_proj):
    # Same bf16-compute / f32-accumulate recipe the kernel uses, for a tight check.
    E = x.shape[-1]
    xb = x.reshape(-1, E).astype(jnp.bfloat16)
    h = jnp.dot(xb, w_fc.astype(jnp.bfloat16), preferred_element_type=jnp.float32)
    h = jnp.maximum(h, 0.0) ** 2
    o = jnp.dot(h.astype(jnp.bfloat16), w_proj.astype(jnp.bfloat16),
                preferred_element_type=jnp.float32)
    return o.reshape(x.shape).astype(x.dtype)


if __name__ == "__main__":
    key = jax.random.PRNGKey(0)
    k1, k2, k3, k4, k5, k6 = jax.random.split(key, 6)

    # --- Test 1: config implied by the module (small): n_embd -> 4*n_embd -> n_embd ---
    batch, seq, n_embd = 2, 8, 32
    hidden = 4 * n_embd  # 128
    x = jax.random.normal(k1, (batch, seq, n_embd), dtype=jnp.float32)
    w_fc = jax.random.normal(k2, (n_embd, hidden), dtype=jnp.float32) * 0.02
    w_proj_zero = jnp.zeros((hidden, n_embd), dtype=jnp.float32)  # c_proj.weight.data.zero_()

    wfc_b, wpz_b = prepare_mlp_weights(w_fc, w_proj_zero)          # cast once at "init"
    out0 = jax.block_until_ready(mlp_pallas(x, wfc_b, wpz_b))
    assert out0.shape == x.shape and out0.dtype == x.dtype
    assert jnp.allclose(out0, jnp.zeros_like(out0))                # zero-init proj => exact zeros

    # Non-trivial proj weights for a meaningful numerical check.
    w_proj = jax.random.normal(k3, (hidden, n_embd), dtype=jnp.float32) * 0.02
    _, wp_b = prepare_mlp_weights(w_fc, w_proj)
    out1 = jax.block_until_ready(mlp_pallas(x, wfc_b, wp_b))
    assert jnp.allclose(out1, _ref_bf16(x, w_fc, w_proj), atol=1e-4, rtol=1e-3)
    assert jnp.allclose(out1, _ref_f32(x, w_fc, w_proj), atol=2e-2, rtol=2e-2)

    # --- Test 2: exercises M padding and multi-step hidden-dim accumulation (explicit tiles) ---
    E2, H2 = 128, 512
    x2 = jax.random.normal(k4, (4, 25, E2), dtype=jnp.float32)     # M=100 -> padded
    w_fc2 = jax.random.normal(k5, (E2, H2), dtype=jnp.float32) * 0.02
    w_proj2 = jax.random.normal(k6, (H2, E2), dtype=jnp.float32) * 0.02
    wfc2_b, wp2_b = prepare_mlp_weights(w_fc2, w_proj2)
    out2 = jax.block_until_ready(mlp_pallas(x2, wfc2_b, wp2_b, tm=64, th=128))
    assert out2.shape == x2.shape and out2.dtype == x2.dtype
    assert jnp.allclose(out2, _ref_bf16(x2, w_fc2, w_proj2), atol=1e-4, rtol=1e-3)
    assert jnp.allclose(out2, _ref_f32(x2, w_fc2, w_proj2), atol=2e-2, rtol=2e-2)

    # --- Test 3: default auto-tiling path (weights VMEM-resident, M split across 2 tiles) ---
    x3 = jax.random.normal(k1, (3, 50, E2), dtype=jnp.float32)     # M=150 -> tm ~ M/2, padded
    out3 = jax.block_until_ready(mlp_pallas(x3, wfc2_b, wp2_b))
    assert out3.shape == x3.shape and out3.dtype == x3.dtype
    assert jnp.allclose(out3, _ref_bf16(x3, w_fc2, w_proj2), atol=1e-4, rtol=1e-3)
    assert jnp.allclose(out3, _ref_f32(x3, w_fc2, w_proj2), atol=2e-2, rtol=2e-2)

    print("KERNEL_OK")
</pallas_src>

<mosaic_0001>
module attributes {stable_mosaic.version = 11 : i64} {
  func.func @_mlp_kernel(%arg0: i32, %arg1: i32, %arg2: memref<8x32xbf16, #tpu.memory_space<vmem>>, %arg3: memref<32x128xbf16, #tpu.memory_space<vmem>>, %arg4: memref<128x32xbf16, #tpu.memory_space<vmem>>, %arg5: memref<8x32xf32, #tpu.memory_space<vmem>>, %arg6: memref<8x32xf32, #tpu.memory_space<vmem>>) attributes {dimension_semantics = [#tpu.dimension_semantics<parallel>, #tpu.dimension_semantics<arbitrary>], iteration_bounds = array<i64: 2, 1>, scalar_prefetch = 0 : i64, scratch_operands = 1 : i64, tpu.core_type = #tpu.core_type<tc>, window_params = [{transform_indices = @transform_0, window_bounds = array<i64: 8, 32>}, {transform_indices = @transform_1, window_bounds = array<i64: 32, 128>}, {transform_indices = @transform_2, window_bounds = array<i64: 128, 32>}, {transform_indices = @transform_3, window_bounds = array<i64: 8, 32>}]} {
    %c0_i32 = arith.constant 0 : i32
    %0 = arith.cmpi eq, %arg1, %c0_i32 : i32
    %1 = arith.extui %0 : i1 to i32
    %c0_i32_0 = arith.constant 0 : i32
    %2 = arith.cmpi ne, %1, %c0_i32_0 : i32
    scf.if %2 {
      %cst_14 = arith.constant 0.000000e+00 : f32
      %18 = vector.broadcast %cst_14 : f32 to vector<8x32xf32>
      %c0_15 = arith.constant 0 : index
      %c0_16 = arith.constant 0 : index
      %19 = vector.load %arg6[%c0_15, %c0_16] : memref<8x32xf32, #tpu.memory_space<vmem>>, vector<8x32xf32>
      tpu.vector_store %arg6[%c0_15, %c0_16], %18 {strides = array<i32>} : memref<8x32xf32, #tpu.memory_space<vmem>>, vector<8x32xf32>,
    } else {
    }
    %c0 = arith.constant 0 : index
    %c0_1 = arith.constant 0 : index
    %3 = vector.load %arg2[%c0, %c0_1] : memref<8x32xbf16, #tpu.memory_space<vmem>>, vector<8x32xbf16>
    %c0_2 = arith.constant 0 : index
    %c0_3 = arith.constant 0 : index
    %4 = vector.load %arg3[%c0_2, %c0_3] : memref<32x128xbf16, #tpu.memory_space<vmem>>, vector<32x128xbf16>
    %cst = arith.constant dense<0.000000e+00> : vector<8x128xf32>
    %5 = tpu.matmul %3, %4, %cst {dimension_numbers = #tpu.dot_dimension_numbers<[1], [0], [0], [1], [0, 0, 1, 1], [], []>} : vector<8x32xbf16>, vector<32x128xbf16>, vector<8x128xf32> -> vector<8x128xf32>
    %cst_4 = arith.constant 0.000000e+00 : f32
    %6 = vector.broadcast %cst_4 : f32 to vector<8x128xf32>
    %7 = arith.maximumf %5, %6 : vector<8x128xf32>
    %8 = arith.mulf %7, %7 : vector<8x128xf32>
    %c0_5 = arith.constant 0 : index
    %c0_6 = arith.constant 0 : index
    %9 = vector.load %arg6[%c0_5, %c0_6] : memref<8x32xf32, #tpu.memory_space<vmem>>, vector<8x32xf32>
    %10 = arith.truncf %8 : vector<8x128xf32> to vector<8x128xbf16>
    %c0_7 = arith.constant 0 : index
    %c0_8 = arith.constant 0 : index
    %11 = vector.load %arg4[%c0_7, %c0_8] : memref<128x32xbf16, #tpu.memory_space<vmem>>, vector<128x32xbf16>
    %cst_9 = arith.constant dense<0.000000e+00> : vector<8x32xf32>
    %12 = tpu.matmul %10, %11, %cst_9 {dimension_numbers = #tpu.dot_dimension_numbers<[1], [0], [0], [1], [0, 0, 1, 1], [], []>} : vector<8x128xbf16>, vector<128x32xbf16>, vector<8x32xf32> -> vector<8x32xf32>
    %13 = arith.addf %9, %12 : vector<8x32xf32>
    %c0_10 = arith.constant 0 : index
    %c0_11 = arith.constant 0 : index
    %14 = vector.load %arg6[%c0_10, %c0_11] : memref<8x32xf32, #tpu.memory_space<vmem>>, vector<8x32xf32>
    tpu.vector_store %arg6[%c0_10, %c0_11], %13 {strides = array<i32>} : memref<8x32xf32, #tpu.memory_space<vmem>>, vector<8x32xf32>,
    %c0_i32_12 = arith.constant 0 : i32
    %15 = arith.cmpi eq, %arg1, %c0_i32_12 : i32
    %16 = arith.extui %15 : i1 to i32
    %c0_i32_13 = arith.constant 0 : i32
    %17 = arith.cmpi ne, %16, %c0_i32_13 : i32
    scf.if %17 {
      %c0_14 = arith.constant 0 : index
      %c0_15 = arith.constant 0 : index
      %18 = vector.load %arg6[%c0_14, %c0_15] : memref<8x32xf32, #tpu.memory_space<vmem>>, vector<8x32xf32>
      %c0_16 = arith.constant 0 : index
      %c0_17 = arith.constant 0 : index
      %19 = vector.load %arg5[%c0_16, %c0_17] : memref<8x32xf32, #tpu.memory_space<vmem>>, vector<8x32xf32>
      tpu.vector_store %arg5[%c0_16, %c0_17], %18 {strides = array<i32>} : memref<8x32xf32, #tpu.memory_space<vmem>>, vector<8x32xf32>,
    } else {
    }
    return
  }
  func.func @transform_0(%arg0: i32, %arg1: i32) -> (i32, i32) {
    %c0_i32 = arith.constant 0 : i32
    %c0_i32_0 = arith.constant 0 : i32
    return %arg0, %c0_i32 : i32, i32
  }
  func.func @transform_1(%arg0: i32, %arg1: i32) -> (i32, i32) {
    %c0_i32 = arith.constant 0 : i32
    %c0_i32_0 = arith.constant 0 : i32
    return %c0_i32, %arg1 : i32, i32
  }
  func.func @transform_2(%arg0: i32, %arg1: i32) -> (i32, i32) {
    %c0_i32 = arith.constant 0 : i32
    %c0_i32_0 = arith.constant 0 : i32
    return %arg1, %c0_i32 : i32, i32
  }
  func.func @transform_3(%arg0: i32, %arg1: i32) -> (i32, i32) {
    %c0_i32 = arith.constant 0 : i32
    %c0_i32_0 = arith.constant 0 : i32
    return %arg0, %c0_i32 : i32, i32
  }
}

</mosaic_0001>

<llo_original>
// kernel: tpu_custom_call.1
$region0: #{tpu_custom_call.1}
  #allocation0 [shape = 'u32[]', space=smem, size = 0x4, offset = 0x4, fixed_abs, tag = 'smem constant byte address 0x4 - core index']
  #allocation1 [shape = 'u32[144,128]{1,0:T(1,128)}', space=vmem, size = 0x12000, scoped, tag = 'internal scratch']
  #allocation2 [shape = 'f32[8,32]{1,0:T(8,128)}', space=vmem, size = 0x1000, scoped, tag = 'scratch operand']
  %s0 = inlined_call_operand.vmem [shape: bf16[16,32], index: 0, kind: input, shape index: {}]
  %s1 = inlined_call_operand.vmem [shape: bf16[32,128], index: 1, kind: input, shape index: {}]
  %s2 = inlined_call_operand.vmem [shape: bf16[128,32], index: 2, kind: input, shape index: {}]
  %s3 = inlined_call_operand.hbm [shape: f32[16,32], index: 3, kind: output, shape index: {}]
  %s4 = sld [smem:[#allocation0]]
  $region53: #{tpu_custom_call.1} parent=0
    _
  %s6 = ssub.s32 1, %s4
  %s7 = scalar_select 0, %s6, %s4
  $region1: #{tpu_custom_call.1} parent=0
    #allocation3 [shape = 'u8[8192]{0}', space=vmem, size = 0x2000, scoped, tag = 'output window, operand 0']
    #allocation4 [shape = 's32[2]{0}', space=sflag, size = 0x8, scoped, tag = 'scoped memory for tpu_custom_call.1']
    %8 = vsyncpa [#allocation4], 0
    %s9 = scalar_lea.sflag [#allocation4], 1
    %10 = vsyncpa %s9, 0
    loop: start=0, step=1, limit=4
    $region2: #{tpu_custom_call.1} parent=1 // loop_pre_header
      _
    $region3: #{tpu_custom_call.1} parent=1 // loop_header
      %s12 = sphi 0, %s16
      %p13 = scmp.ge.s32.totalorder %s12, 4
      %s19 = sphi 0, %s31
      %s20 = sphi 0, %s27
      %s21 = sphi 0, %s19
      %s22 = sphi 0, %s20
      %s23 = sphi 0, %s21
      %s24 = sphi 0, %s22
      %s34 = sphi 0, %s36
      %s37 = sphi 0, %s34
      %s38 = sphi 0, %s37
      %s54 = sphi 0, %s38
      %s60 = sphi 0, %s62
      %s63 = sphi 0, %s60
      %s64 = sphi 0, %s63
      %s80 = sphi 0, %s64
      %s86 = sphi 0, %s88
      %s89 = sphi 0, %s86
      %s90 = sphi 0, %s89
      %s106 = sphi 0, %s90
      %s112 = sphi 0, %s114
      %s115 = sphi 0, %s112
      %s116 = sphi 0, %s115
      %s132 = sphi 0, %s116
    $region4: #{tpu_custom_call.1} parent=1 // loop_header_branch
      %15 = sbr.rel (%p13) target = $region8
    $region5: #{tpu_custom_call.1} parent=1 // loop_body
      %s17 = ssub.s32 %s12, 1
      %s18 = ssub.s32 %s12, 2
      %s25 = sadd.s32 1, %s20
      %p26 = scmp.ge.s32.totalorder %s25, 1
      %s27 = scalar_select %p26, 0, %s25
      %s28 = sadd.s32 1, %s19
      %s29 = scalar_select %p26, %s28, %s19
      %p30 = scmp.ge.s32.totalorder %s29, 2
      %s31 = scalar_select %p30, 0, %s29
      %s32 = ssub.s32 %s19, %s31
      %p33 = scmp.eq.s32.totalorder %s32, 0
      %s35 = sadd.s32 %s34, 1
      %s36 = scalar_select %p33, %s34, %s35
      %p39 = pneg %p33
      %p40 = scmp.eq.s32.totalorder %s12, 1
      %p41 = por %p39, %p40
      %p42 = scmp.ne.s32.totalorder %s34, %s37
      %p43 = scmp.eq.s32.totalorder %s12, 0
      %p44 = por %p42, %p43
      %p45 = scmp.ne.s32.totalorder %s34, %s37
      %p46 = scmp.eq.s32.totalorder %s17, 1
      %p47 = por %p45, %p46
      %p48 = scmp.ne.s32.totalorder %s37, %s38
      %p49 = scmp.eq.s32.totalorder %s17, 0
      %p50 = por %p48, %p49
      %p51 = scmp.ne.s32.totalorder %s37, %s38
      %p52 = scmp.eq.s32.totalorder %s18, 1
      %p53 = por %p51, %p52
      %p55 = scmp.ne.s32.totalorder %s38, %s54
      %p56 = scmp.eq.s32.totalorder %s18, 0
      %p57 = por %p55, %p56
      %s58 = ssub.s32 %s20, %s27
      %p59 = scmp.eq.s32.totalorder %s58, 0
      %s61 = sadd.s32 %s60, 1
      %s62 = scalar_select %p59, %s60, %s61
      %p65 = pneg %p59
      %p66 = scmp.eq.s32.totalorder %s12, 1
      %p67 = por %p65, %p66
      %p68 = scmp.ne.s32.totalorder %s60, %s63
      %p69 = scmp.eq.s32.totalorder %s12, 0
      %p70 = por %p68, %p69
      %p71 = scmp.ne.s32.totalorder %s60, %s63
      %p72 = scmp.eq.s32.totalorder %s17, 1
      %p73 = por %p71, %p72
      %p74 = scmp.ne.s32.totalorder %s63, %s64
      %p75 = scmp.eq.s32.totalorder %s17, 0
      %p76 = por %p74, %p75
      %p77 = scmp.ne.s32.totalorder %s63, %s64
      %p78 = scmp.eq.s32.totalorder %s18, 1
      %p79 = por %p77, %p78
      %p81 = scmp.ne.s32.totalorder %s64, %s80
      %p82 = scmp.eq.s32.totalorder %s18, 0
      %p83 = por %p81, %p82
      %s84 = ssub.s32 %s20, %s27
      %p85 = scmp.eq.s32.totalorder %s84, 0
      %s87 = sadd.s32 %s86, 1
      %s88 = scalar_select %p85, %s86, %s87
      %p91 = pneg %p85
      %p92 = scmp.eq.s32.totalorder %s12, 1
      %p93 = por %p91, %p92
      %p94 = scmp.ne.s32.totalorder %s86, %s89
      %p95 = scmp.eq.s32.totalorder %s12, 0
      %p96 = por %p94, %p95
      %p97 = scmp.ne.s32.totalorder %s86, %s89
      %p98 = scmp.eq.s32.totalorder %s17, 1
      %p99 = por %p97, %p98
      %p100 = scmp.ne.s32.totalorder %s89, %s90
      %p101 = scmp.eq.s32.totalorder %s17, 0
      %p102 = por %p100, %p101
      %p103 = scmp.ne.s32.totalorder %s89, %s90
      %p104 = scmp.eq.s32.totalorder %s18, 1
      %p105 = por %p103, %p104
      %p107 = scmp.ne.s32.totalorder %s90, %s106
      %p108 = scmp.eq.s32.totalorder %s18, 0
      %p109 = por %p107, %p108
      %s110 = ssub.s32 %s19, %s31
      %p111 = scmp.eq.s32.totalorder %s110, 0
      %s113 = sadd.s32 %s112, 1
      %s114 = scalar_select %p111, %s112, %s113
      %p117 = pneg %p111
      %p118 = scmp.eq.s32.totalorder %s12, 1
      %p119 = por %p117, %p118
      %p120 = scmp.ne.s32.totalorder %s112, %s115
      %p121 = scmp.eq.s32.totalorder %s12, 0
      %p122 = por %p120, %p121
      %p123 = scmp.ne.s32.totalorder %s112, %s115
      %p124 = scmp.eq.s32.totalorder %s17, 1
      %p125 = por %p123, %p124
      %p126 = scmp.ne.s32.totalorder %s115, %s116
      %p127 = scmp.eq.s32.totalorder %s17, 0
      %p128 = por %p126, %p127
      %p129 = scmp.ne.s32.totalorder %s115, %s116
      %p130 = scmp.eq.s32.totalorder %s18, 1
      %p131 = por %p129, %p130
      %p133 = scmp.ne.s32.totalorder %s116, %s132
      %p134 = scmp.eq.s32.totalorder %s18, 0
      %p135 = por %p133, %p134
      %p136 = scmp.le.s32.totalorder 1, %s12
      %p137 = scmp.lt.s32.totalorder %s12, 3
      %p138 = pnand %p136, %p137
      %p139 = pneg %p138
      // Predicated region
      $region9: #{tpu_custom_call.1} parent=5 // pred_check
        _
      $region10: #{tpu_custom_call.1} parent=5 // pred_check_branch
        %141 = sbr.rel (%p138) target = $region12
      $region11: #{tpu_custom_call.1} parent=5 // pred_region
        %s142 = ssub.s32 %s12, 1
        // Predicated region
        $region13: #{tpu_custom_call.1} parent=11 // pred_check
          %p143 = pneg %p76
        $region14: #{tpu_custom_call.1} parent=11 // pred_check_branch
          %145 = sbr.rel (%p143) target = $region16
        $region15: #{tpu_custom_call.1} parent=11 // pred_region
          %p146 = scmp.lt.s32.totalorder %s22, 0
          %s147 = scalar_select %p146, %s22, 0
          %s148 = smul.addr %s147, 4
          %s149 = scalar_lea.vmem %s1, %s148
        $region16: #{tpu_custom_call.1} parent=11 // pred_fallthru
          _
        // Predicated region
        $region17: #{tpu_custom_call.1} parent=11 // pred_check
          %p150 = pneg %p102
        $region18: #{tpu_custom_call.1} parent=11 // pred_check_branch
          %152 = sbr.rel (%p150) target = $region20
        $region19: #{tpu_custom_call.1} parent=11 // pred_region
          %s153 = smul.u32 16, %s22
          %p154 = scmp.lt.s32.totalorder %s153, 15
          %s155 = scalar_select %p154, %s153, 15
          %s156 = smul.addr %s155, 4
          %s157 = scalar_lea.vmem %s2, %s156
          %s158 = smul.u32 16, %s22
        $region20: #{tpu_custom_call.1} parent=11 // pred_fallthru
          _
      $region12: #{tpu_custom_call.1} parent=5 // pred_fallthru
        _
      %p159 = scmp.lt.s32.totalorder %s12, 2
      // Predicated region
      $region21: #{tpu_custom_call.1} parent=5 // pred_check
        %p160 = pneg %p159
      $region22: #{tpu_custom_call.1} parent=5 // pred_check_branch
        %162 = sbr.rel (%p160) target = $region24
      $region23: #{tpu_custom_call.1} parent=5 // pred_region
        // Predicated region
        $region25: #{tpu_custom_call.1} parent=23 // pred_check
          %p163 = pneg %p44
        $region26: #{tpu_custom_call.1} parent=23 // pred_check_branch
          %165 = sbr.rel (%p163) target = $region28
        $region27: #{tpu_custom_call.1} parent=23 // pred_region
          %p166 = scmp.lt.s32.totalorder %s19, 1
          %s167 = scalar_select %p166, %s19, 1
          %s168 = smul.addr %s167, 4
          %s169 = scalar_lea.vmem %s0, %s168
        $region28: #{tpu_custom_call.1} parent=23 // pred_fallthru
          _
      $region24: #{tpu_custom_call.1} parent=5 // pred_fallthru
        _
      %p170 = scmp.le.s32.totalorder 1, %s12
      %p171 = scmp.lt.s32.totalorder %s12, 3
      %p172 = pnand %p170, %p171
      %p173 = pneg %p172
      // Predicated region
      $region29: #{tpu_custom_call.1} parent=5 // pred_check
        _
      $region30: #{tpu_custom_call.1} parent=5 // pred_check_branch
        %175 = sbr.rel (%p172) target = $region32
      $region31: #{tpu_custom_call.1} parent=5 // pred_region
        %s176 = ssub.s32 %s12, 1
        %p177 = scmp.lt.s32.totalorder %s21, 1
        %s178 = scalar_select %p177, %s21, 1
        %s179 = smul.addr %s178, 4
        %s180 = scalar_lea.vmem %s0, %s179
        %p181 = pneg %p50
        %p182 = pneg %p47
        %p183 = scmp.lt.s32.totalorder %s22, 0
        %s184 = scalar_select %p183, %s22, 0
        %s185 = smul.addr %s184, 4
        %s186 = scalar_lea.vmem %s1, %s185
        %p187 = pneg %p76
        %p188 = pneg %p73
        %s189 = smul.u32 16, %s22
        %p190 = scmp.lt.s32.totalorder %s189, 15
        %s191 = scalar_select %p190, %s189, 15
        %s192 = smul.addr %s191, 4
        %s193 = scalar_lea.vmem %s2, %s192
        %p194 = pneg %p102
        %p195 = pneg %p99
        %p196 = pneg %p128
        %p197 = pneg %p125
        %s198 = sand.u32 %s115, 1
        %s199 = scalar_lea.sflag [#allocation4], %s198
        %s200 = sand.u32 %s115, 1
        %s201 = smul.addr %s200, 8
        %s202 = scalar_lea.vmem [#allocation3], %s201
        %p203 = scmp.lt.s32.totalorder %s21, 1
        %s204 = scalar_select %p203, %s21, 1
        %s205 = smul.addr %s204, 4
        %s206 = scalar_lea.vmem %s0, %s205
        %p207 = scmp.lt.s32.totalorder %s22, 0
        %s208 = scalar_select %p207, %s22, 0
        %s209 = smul.addr %s208, 4
        %s210 = scalar_lea.vmem %s1, %s209
        %s211 = smul.u32 16, %s22
        %p212 = scmp.lt.s32.totalorder %s211, 15
        %s213 = scalar_select %p212, %s211, 15
        %s214 = smul.addr %s213, 4
        %s215 = scalar_lea.vmem %s2, %s214
        %s216 = smul.u32 16, %s22
        %p218 = scmp.eq.s32.totalorder %s22, 0
        // Predicated region
        $region33: #{tpu_custom_call.1} parent=31 // pred_check
          %p219 = pneg %p218
        $region34: #{tpu_custom_call.1} parent=31 // pred_check_branch
          %221 = sbr.rel (%p219) target = $region36
        $region35: #{tpu_custom_call.1} parent=31 // pred_region
          %vm222 = vcmask 261120
          %223 = vst.msk [vmem:[#allocation2] sm:$0xff] %vm222, 0.0
        $region36: #{tpu_custom_call.1} parent=31 // pred_fallthru
          _
        %v224 = vld [vmem:[%s206] sm:$0xf]
        %v225 = vld [vmem:[%s210] sm:$0xf]
        %v226 = vld [vmem:[%s210 + $0x4] sm:$0xf]
        %v227 = vld [vmem:[%s210 + $0x8] sm:$0xf]
        %v228 = vld [vmem:[%s210 + $0xc] sm:$0xf]
        %v233 = vunpack.c.l.b16 %v225
        %v234 = vunpack.c.l.b16 %v226
        %v235 = vunpack.c.l.b16 %v227
        %v236 = vunpack.c.l.b16 %v228
        %v237 = vpack.c.b16 %v234, %v233
        %v238 = vpack.c.b16 %v236, %v235
        %vm241 = vcmask 261120
        %v243 = vsel %vm241, %v224, 0
        %245 = vmatprep.subr.bf16.mxu0 0
        %246 = vmatpush1.bf16.msra.mxu0 %v237
        %247 = vmatprep.subr.bf16.mxu0 0
        %248 = vmatpush1.bf16.msra.mxu0 %v238
        %249 = vmatprep.subr.bf16.mxu0 0
        %250 = vmatpush1.bf16.msra.mxu0 0
        %251 = vmatprep.subr.bf16.mxu0 0
        %252 = vmatpush1.bf16.msra.mxu0 0
        %253 = vmatprep.subr.bf16.mxu0 0
        %254 = vmatpush1.bf16.msra.mxu0 0
        %255 = vmatprep.subr.bf16.mxu0 0
        %256 = vmatpush1.bf16.msra.mxu0 0
        %257 = vmatprep.subr.bf16.mxu0 0
        %258 = vmatpush1.bf16.msra.mxu0 0
        %259 = vmatprep.subr.bf16.mxu0 0
        %260 = vmatpush1.bf16.msra.mxu0 0
        %261 = vmatprep.subr.bf16.mxu0 0
        %262 = vmatpush1.bf16.msra.mxu0 0
        %263 = vmatprep.subr.bf16.mxu0 0
        %264 = vmatpush1.bf16.msra.mxu0 0
        %265 = vmatprep.subr.bf16.mxu0 0
        %266 = vmatpush1.bf16.msra.mxu0 0
        %267 = vmatprep.subr.bf16.mxu0 0
        %268 = vmatpush1.bf16.msra.mxu0 0
        %269 = vmatprep.subr.bf16.mxu0 0
        %270 = vmatpush1.bf16.msra.mxu0 0
        %271 = vmatprep.subr.bf16.mxu0 0
        %272 = vmatpush1.bf16.msra.mxu0 0
        %273 = vmatprep.subr.bf16.mxu0 0
        %274 = vmatpush1.bf16.msra.mxu0 0
        %275 = vmatprep.subr.bf16.mxu0 0
        %276 = vmatpush1.bf16.msra.mxu0 0
        %277 = vmatprep.mubr.bf16.mxu0 0
        %278 = vmatmul.mubr.bf16.gmra.mrb[0].mxu0 %v243
        %v279 = vpop.f32.mrb[0].mxu0
        %v280 = vadd.f32 0.0, %v279
        %v281 = vpop.f32.mrb[0].mxu0
        %v282 = vpop.f32.mrb[0].mxu0
        %v283 = vpop.f32.mrb[0].mxu0
        %284 = vdwg.mxu0
        %v285 = vmax.f32 %v280, 0.0
        %v286 = vmul.f32 %v285, %v285
        %v287 = vld [vmem:[#allocation2] sm:$0xff]
        %v288 = vpack.c.bf16 %v286, %v286
        %v289 = vld [vmem:[%s215] sm:$0xf]
        %v290 = vld [vmem:[%s215 + $0x4] sm:$0xf]
        %v291 = vld [vmem:[%s215 + $0x8] sm:$0xf]
        %v292 = vld [vmem:[%s215 + $0xc] sm:$0xf]
        %v293 = vld [vmem:[%s215 + $0x10] sm:$0xf]
        %v294 = vld [vmem:[%s215 + $0x14] sm:$0xf]
        %v295 = vld [vmem:[%s215 + $0x18] sm:$0xf]
        %v296 = vld [vmem:[%s215 + $0x1c] sm:$0xf]
        %v297 = vld [vmem:[%s215 + $0x20] sm:$0xf]
        %v298 = vld [vmem:[%s215 + $0x24] sm:$0xf]
        %v299 = vld [vmem:[%s215 + $0x28] sm:$0xf]
        %v300 = vld [vmem:[%s215 + $0x2c] sm:$0xf]
        %v301 = vld [vmem:[%s215 + $0x30] sm:$0xf]
        %v302 = vld [vmem:[%s215 + $0x34] sm:$0xf]
        %v303 = vld [vmem:[%s215 + $0x38] sm:$0xf]
        %v304 = vld [vmem:[%s215 + $0x3c] sm:$0xf]
        %v321 = vunpack.c.l.b16 %v289
        %v322 = vunpack.c.l.b16 %v290
        %v323 = vunpack.c.l.b16 %v291
        %v324 = vunpack.c.l.b16 %v292
        %v325 = vunpack.c.l.b16 %v293
        %v326 = vunpack.c.l.b16 %v294
        %v327 = vunpack.c.l.b16 %v295
        %v328 = vunpack.c.l.b16 %v296
        %v329 = vunpack.c.l.b16 %v297
        %v330 = vunpack.c.l.b16 %v298
        %v331 = vunpack.c.l.b16 %v299
        %v332 = vunpack.c.l.b16 %v300
        %v333 = vunpack.c.l.b16 %v301
        %v334 = vunpack.c.l.b16 %v302
        %v335 = vunpack.c.l.b16 %v303
        %v336 = vunpack.c.l.b16 %v304
        %v337 = vpack.c.b16 %v322, %v321
        %v338 = vpack.c.b16 %v324, %v323
        %v339 = vpack.c.b16 %v326, %v325
        %v340 = vpack.c.b16 %v328, %v327
        %v341 = vpack.c.b16 %v330, %v329
        %v342 = vpack.c.b16 %v332, %v331
        %v343 = vpack.c.b16 %v334, %v333
        %v344 = vpack.c.b16 %v336, %v335
        %353 = vmatprep.subr.bf16.mxu0 0
        %354 = vmatpush1.bf16.msra.mxu0 %v337
        %355 = vmatprep.subr.bf16.mxu0 0
        %356 = vmatpush1.bf16.msra.mxu0 %v338
        %357 = vmatprep.subr.bf16.mxu0 0
        %358 = vmatpush1.bf16.msra.mxu0 %v339
        %359 = vmatprep.subr.bf16.mxu0 0
        %360 = vmatpush1.bf16.msra.mxu0 %v340
        %361 = vmatprep.subr.bf16.mxu0 0
        %362 = vmatpush1.bf16.msra.mxu0 %v341
        %363 = vmatprep.subr.bf16.mxu0 0
        %364 = vmatpush1.bf16.msra.mxu0 %v342
        %365 = vmatprep.subr.bf16.mxu0 0
        %366 = vmatpush1.bf16.msra.mxu0 %v343
        %367 = vmatprep.subr.bf16.mxu0 0
        %368 = vmatpush1.bf16.msra.mxu0 %v344
        %369 = vmatprep.subr.bf16.mxu0 0
        %370 = vmatpush1.bf16.msra.mxu0 0
        %371 = vmatprep.subr.bf16.mxu0 0
        %372 = vmatpush1.bf16.msra.mxu0 0
        %373 = vmatprep.subr.bf16.mxu0 0
        %374 = vmatpush1.bf16.msra.mxu0 0
        %375 = vmatprep.subr.bf16.mxu0 0
        %376 = vmatpush1.bf16.msra.mxu0 0
        %377 = vmatprep.subr.bf16.mxu0 0
        %378 = vmatpush1.bf16.msra.mxu0 0
        %379 = vmatprep.subr.bf16.mxu0 0
        %380 = vmatpush1.bf16.msra.mxu0 0
        %381 = vmatprep.subr.bf16.mxu0 0
        %382 = vmatpush1.bf16.msra.mxu0 0
        %383 = vmatprep.subr.bf16.mxu0 0
        %384 = vmatpush1.bf16.msra.mxu0 0
        %385 = vmatprep.mubr.bf16.mxu0 0
        %386 = vmatmul.mubr.bf16.gmra.mrb[0].mxu0 %v288
        %v387 = vpop.f32.mrb[0].mxu0
        %v388 = vadd.f32 0.0, %v387
        %v389 = vpop.f32.mrb[0].mxu0
        %v390 = vpop.f32.mrb[0].mxu0
        %v391 = vpop.f32.mrb[0].mxu0
        %392 = vdwg.mxu0
        %v393 = vadd.f32 %v287, %v388
        %394 = vst.msk [vmem:[#allocation2] sm:$0xff] %vm241, %v393
        // Predicated region
        $region37: #{tpu_custom_call.1} parent=31 // pred_check
          %p395 = pneg %p218
        $region38: #{tpu_custom_call.1} parent=31 // pred_check_branch
          %397 = sbr.rel (%p395) target = $region40
        $region39: #{tpu_custom_call.1} parent=31 // pred_region
          %v398 = vld [vmem:[#allocation2] sm:$0xff]
          %399 = vst.msk [vmem:[%s202] sm:$0xff] %vm241, %v398
        $region40: #{tpu_custom_call.1} parent=31 // pred_fallthru
          _
        %s400 = sand.u32 %s115, 1
        %s401 = scalar_lea.sflag [#allocation4], %s400
        %s402 = sand.u32 %s115, 1
        %s403 = smul.addr %s402, 8
        %s404 = scalar_lea.vmem [#allocation3], %s403
        // Predicated region
        $region41: #{tpu_custom_call.1} parent=31 // pred_check
          %p405 = pneg %p125
        $region42: #{tpu_custom_call.1} parent=31 // pred_check_branch
          %407 = sbr.rel (%p405) target = $region44
        $region43: #{tpu_custom_call.1} parent=31 // pred_region
          %s409 = ssub.s32 128, 128
          %410 = vsyncadd %s401, %s409
          %s411 = smul.addr %s21, 128
          %s412 = scalar_lea.hbm %s3, %s411
          %s414 = sshll.u32 %s404, 4
          %s415 = int_to_ptr.vmem [resolvable:$true] %s414
          %417 = dma.vmem_to_hbm [thread:$0]  %s415, 128, %s412, %s401
        $region44: #{tpu_custom_call.1} parent=31 // pred_fallthru
          _
      $region32: #{tpu_custom_call.1} parent=5 // pred_fallthru
        _
      %p418 = scmp.le.s32.totalorder 2, %s12
      // Predicated region
      $region45: #{tpu_custom_call.1} parent=5 // pred_check
        %p419 = pneg %p418
      $region46: #{tpu_custom_call.1} parent=5 // pred_check_branch
        %421 = sbr.rel (%p419) target = $region48
      $region47: #{tpu_custom_call.1} parent=5 // pred_region
        %s422 = ssub.s32 %s12, 2
        // Predicated region
        $region49: #{tpu_custom_call.1} parent=47 // pred_check
          %p423 = pneg %p131
        $region50: #{tpu_custom_call.1} parent=47 // pred_check_branch
          %425 = sbr.rel (%p423) target = $region52
        $region51: #{tpu_custom_call.1} parent=47 // pred_region
          %s426 = sand.u32 %s116, 1
          %s427 = scalar_lea.sflag [#allocation4], %s426
          %s428 = sand.u32 %s116, 1
          %s429 = smul.addr %s428, 8
          %s430 = scalar_lea.vmem [#allocation3], %s429
          %431 = dma.done %s427, 128
        $region52: #{tpu_custom_call.1} parent=47 // pred_fallthru
          _
      $region48: #{tpu_custom_call.1} parent=5 // pred_fallthru
        _
    $region6: #{tpu_custom_call.1} parent=1 // loop_footer
      %s16 = sadd.s32 1, %s12
    $region7: #{tpu_custom_call.1} parent=1 // loop_footer_branch
      %11 = sbr.rel target = $region3
    $region8: #{tpu_custom_call.1} parent=1 // loop_exit
      _
    %432 = vsyncpa [#allocation4], 1
    %s433 = scalar_lea.sflag [#allocation4], 1
    %434 = vsyncpa %s433, 1

</llo_original>
